<compile_context>
chip_gen: v5e
topology: v5e:2x2
jax: 0.10.0
libtpu: 0.0.40
codegen_flags: <defaults>
</compile_context>

<pallas_src>
import functools

import jax
import jax.numpy as jnp
from jax import lax
from jax.experimental import pallas as pl
from jax.experimental.pallas import tpu as pltpu


def _simsiam_kernel(p1_ref, z1_ref, p2_ref, z2_ref, out_ref, *, batch, needs_mask):
    i = pl.program_id(0)
    eps = jnp.float32(1e-8)
    tb = p1_ref.shape[0]

    @pl.when(i == 0)
    def _init():
        out_ref[...] = jnp.zeros_like(out_ref)

    # Upcast to f32 inside the kernel (inputs may arrive as bf16 from HBM).
    p1 = p1_ref[...].astype(jnp.float32)
    z1 = z1_ref[...].astype(jnp.float32)
    p2 = p2_ref[...].astype(jnp.float32)
    z2 = z2_ref[...].astype(jnp.float32)

    def cos_rows(p, z):
        dot = jnp.sum(p * z, axis=-1, keepdims=True)                # (tb, 1)
        pn = jnp.sqrt(jnp.sum(p * p, axis=-1, keepdims=True))       # (tb, 1)
        zn = jnp.sqrt(jnp.sum(z * z, axis=-1, keepdims=True))       # (tb, 1)
        denom = jnp.maximum(pn * zn, eps)                           # PyTorch parity
        return dot * pl.reciprocal(denom, approx=False)             # (tb, 1)

    contrib = cos_rows(p1, z2) + cos_rows(p2, z1)                   # (tb, 1)

    if needs_mask:
        # Mask rows past the true batch size (remainder tile). jnp.where (not a
        # multiply) so uninitialized OOB rows (possibly NaN/inf) cannot leak in.
        row = lax.broadcasted_iota(jnp.int32, (tb, 1), 0) + i * tb
        contrib = jnp.where(row < batch, contrib, jnp.float32(0.0))

    out_ref[...] += jnp.sum(contrib, axis=0, keepdims=True)

    @pl.when(i == pl.num_programs(0) - 1)
    def _finalize():
        # loss = -0.5 / B * (sum cos(p1, z2) + sum cos(p2, z1))
        out_ref[...] = out_ref[...] * jnp.float32(-0.5 / batch)


def _choose_tile_b(B, D, itemsize):
    """Rows per tile: big enough to amortize per-step overhead, small enough
    that 4 inputs x 2 pipeline buffers stay within ~32 MiB of VMEM."""
    if B <= 512:
        return B  # full batch as one block (also satisfies the tiling rule for any B)
    budget = 32 << 20
    tb = budget // (4 * 2 * D * itemsize)
    return min(512, max(8, (tb // 8) * 8))


def simsiam_loss(p1, z1, p2, z2, *, tile_b=None):
    B, D = p1.shape
    itemsize = jnp.dtype(p1.dtype).itemsize
    if tile_b is None:
        tile_b = _choose_tile_b(B, D, itemsize)
    grid = (pl.cdiv(B, tile_b),)
    needs_mask = (B % tile_b) != 0

    in_spec = pl.BlockSpec((tile_b, D), lambda i: (i, 0))
    kernel = functools.partial(_simsiam_kernel, batch=B, needs_mask=needs_mask)

    cost = pl.CostEstimate(
        flops=12 * B * D,
        transcendentals=4 * B,
        bytes_accessed=4 * B * D * itemsize + 4,
    )

    out = pl.pallas_call(
        kernel,
        out_shape=jax.ShapeDtypeStruct((1, 1), jnp.float32),
        grid=grid,
        in_specs=[in_spec, in_spec, in_spec, in_spec],
        # Same block index every step -> output stays resident (accumulator).
        out_specs=pl.BlockSpec((1, 1), lambda i: (0, 0)),
        compiler_params=pltpu.CompilerParams(
            dimension_semantics=("arbitrary",),
            vmem_limit_bytes=64 << 20,
        ),
        cost_estimate=cost,
    )(p1, z1, p2, z2)
    return out[0, 0]


def simsiam_loss_ref(p1, z1, p2, z2):
    """Pure-JAX reference matching the PyTorch module (version='simplified').
    z.detach() only affects gradients, not the forward value."""

    def neg_cos_mean(p, z):
        p = p.astype(jnp.float32)
        z = z.astype(jnp.float32)
        dot = jnp.sum(p * z, axis=-1)
        pn = jnp.linalg.norm(p, axis=-1)
        zn = jnp.linalg.norm(z, axis=-1)
        cos = dot / jnp.maximum(pn * zn, 1e-8)
        return -jnp.mean(cos)

    return 0.5 * (neg_cos_mean(p1, z2) + neg_cos_mean(p2, z1))


if __name__ == "__main__":
    # --- small f32 case (single tile) ---------------------------------------
    B, D = 8, 32
    k = jax.random.split(jax.random.PRNGKey(0), 4)
    p1, z1, p2, z2 = (jax.random.normal(k[i], (B, D), dtype=jnp.float32) for i in range(4))
    out = jax.block_until_ready(simsiam_loss(p1, z1, p2, z2))
    ref = jax.block_until_ready(simsiam_loss_ref(p1, z1, p2, z2))
    assert jnp.allclose(out, ref, atol=1e-5, rtol=1e-5), (out, ref)

    # --- tiled path with a masked remainder tile (B=20, TB=8 -> 3 tiles) ----
    B2, D2 = 20, 32
    k2 = jax.random.split(jax.random.PRNGKey(1), 4)
    a1, b1, a2, b2 = (jax.random.normal(k2[i], (B2, D2), dtype=jnp.float32) for i in range(4))
    out2 = jax.block_until_ready(simsiam_loss(a1, b1, a2, b2, tile_b=8))
    ref2 = jax.block_until_ready(simsiam_loss_ref(a1, b1, a2, b2))
    assert jnp.allclose(out2, ref2, atol=1e-5, rtol=1e-5), (out2, ref2)

    # --- native bf16 inputs (half the HBM bytes; upcast happens in-kernel) --
    p1b, z1b, p2b, z2b = (x.astype(jnp.bfloat16) for x in (p1, z1, p2, z2))
    out3 = jax.block_until_ready(simsiam_loss(p1b, z1b, p2b, z2b))
    ref3 = jax.block_until_ready(simsiam_loss_ref(p1b, z1b, p2b, z2b))
    assert jnp.allclose(out3, ref3, atol=1e-4, rtol=1e-4), (out3, ref3)

    print("KERNEL_OK")
</pallas_src>

<mosaic_0001>
module attributes {stable_mosaic.version = 11 : i64} {
  func.func @_simsiam_kernel(%arg0: i32, %arg1: memref<8x32xf32, #tpu.memory_space<vmem>>, %arg2: memref<8x32xf32, #tpu.memory_space<vmem>>, %arg3: memref<8x32xf32, #tpu.memory_space<vmem>>, %arg4: memref<8x32xf32, #tpu.memory_space<vmem>>, %arg5: memref<1x1xf32, #tpu.memory_space<vmem>>) attributes {dimension_semantics = [#tpu.dimension_semantics<arbitrary>], iteration_bounds = array<i64: 1>, scalar_prefetch = 0 : i64, scratch_operands = 0 : i64, tpu.core_type = #tpu.core_type<tc>, window_params = [{transform_indices = @transform_0, window_bounds = array<i64: 8, 32>}, {transform_indices = @transform_1, window_bounds = array<i64: 8, 32>}, {transform_indices = @transform_2, window_bounds = array<i64: 8, 32>}, {transform_indices = @transform_3, window_bounds = array<i64: 8, 32>}, {pipeline_mode = #tpu.pipeline_mode<synchronous>, transform_indices = @transform_4, window_bounds = array<i64: 1, 1>}]} {
    %c0_i32 = arith.constant 0 : i32
    %0 = arith.cmpi eq, %arg0, %c0_i32 : i32
    %1 = arith.extui %0 : i1 to i32
    %c0_i32_0 = arith.constant 0 : i32
    %2 = arith.cmpi ne, %1, %c0_i32_0 : i32
    scf.if %2 {
      %cst_22 = arith.constant 0.000000e+00 : f32
      %48 = vector.broadcast %cst_22 : f32 to vector<1x1xf32>
      %c0_23 = arith.constant 0 : index
      %c0_24 = arith.constant 0 : index
      %49 = vector.load %arg5[%c0_23, %c0_24] : memref<1x1xf32, #tpu.memory_space<vmem>>, vector<1x1xf32>
      tpu.vector_store %arg5[%c0_23, %c0_24], %48 {strides = array<i32>} : memref<1x1xf32, #tpu.memory_space<vmem>>, vector<1x1xf32>,
    } else {
    }
    %c0 = arith.constant 0 : index
    %c0_1 = arith.constant 0 : index
    %3 = vector.load %arg1[%c0, %c0_1] : memref<8x32xf32, #tpu.memory_space<vmem>>, vector<8x32xf32>
    %c0_2 = arith.constant 0 : index
    %c0_3 = arith.constant 0 : index
    %4 = vector.load %arg2[%c0_2, %c0_3] : memref<8x32xf32, #tpu.memory_space<vmem>>, vector<8x32xf32>
    %c0_4 = arith.constant 0 : index
    %c0_5 = arith.constant 0 : index
    %5 = vector.load %arg3[%c0_4, %c0_5] : memref<8x32xf32, #tpu.memory_space<vmem>>, vector<8x32xf32>
    %c0_6 = arith.constant 0 : index
    %c0_7 = arith.constant 0 : index
    %6 = vector.load %arg4[%c0_6, %c0_7] : memref<8x32xf32, #tpu.memory_space<vmem>>, vector<8x32xf32>
    %7 = arith.mulf %3, %6 : vector<8x32xf32>
    %cst = arith.constant dense<0.000000e+00> : vector<8xf32>
    %8 = vector.multi_reduction <add>, %7, %cst [1] : vector<8x32xf32> to vector<8xf32>
    %9 = vector.shape_cast %8 : vector<8xf32> to vector<8x1xf32>
    %10 = arith.mulf %3, %3 : vector<8x32xf32>
    %cst_8 = arith.constant dense<0.000000e+00> : vector<8xf32>
    %11 = vector.multi_reduction <add>, %10, %cst_8 [1] : vector<8x32xf32> to vector<8xf32>
    %12 = vector.shape_cast %11 : vector<8xf32> to vector<8x1xf32>
    %13 = math.sqrt %12 : vector<8x1xf32>
    %14 = arith.mulf %6, %6 : vector<8x32xf32>
    %cst_9 = arith.constant dense<0.000000e+00> : vector<8xf32>
    %15 = vector.multi_reduction <add>, %14, %cst_9 [1] : vector<8x32xf32> to vector<8xf32>
    %16 = vector.shape_cast %15 : vector<8xf32> to vector<8x1xf32>
    %17 = math.sqrt %16 : vector<8x1xf32>
    %18 = arith.mulf %13, %17 : vector<8x1xf32>
    %cst_10 = arith.constant 9.99999993E-9 : f32
    %19 = vector.broadcast %cst_10 : f32 to vector<8x1xf32>
    %20 = arith.maximumf %18, %19 : vector<8x1xf32>
    %21 = tpu.reciprocal %20 : vector<8x1xf32> -> vector<8x1xf32>
    %22 = arith.mulf %9, %21 : vector<8x1xf32>
    %23 = arith.mulf %5, %4 : vector<8x32xf32>
    %cst_11 = arith.constant dense<0.000000e+00> : vector<8xf32>
    %24 = vector.multi_reduction <add>, %23, %cst_11 [1] : vector<8x32xf32> to vector<8xf32>
    %25 = vector.shape_cast %24 : vector<8xf32> to vector<8x1xf32>
    %26 = arith.mulf %5, %5 : vector<8x32xf32>
    %cst_12 = arith.constant dense<0.000000e+00> : vector<8xf32>
    %27 = vector.multi_reduction <add>, %26, %cst_12 [1] : vector<8x32xf32> to vector<8xf32>
    %28 = vector.shape_cast %27 : vector<8xf32> to vector<8x1xf32>
    %29 = math.sqrt %28 : vector<8x1xf32>
    %30 = arith.mulf %4, %4 : vector<8x32xf32>
    %cst_13 = arith.constant dense<0.000000e+00> : vector<8xf32>
    %31 = vector.multi_reduction <add>, %30, %cst_13 [1] : vector<8x32xf32> to vector<8xf32>
    %32 = vector.shape_cast %31 : vector<8xf32> to vector<8x1xf32>
    %33 = math.sqrt %32 : vector<8x1xf32>
    %34 = arith.mulf %29, %33 : vector<8x1xf32>
    %cst_14 = arith.constant 9.99999993E-9 : f32
    %35 = vector.broadcast %cst_14 : f32 to vector<8x1xf32>
    %36 = arith.maximumf %34, %35 : vector<8x1xf32>
    %37 = tpu.reciprocal %36 : vector<8x1xf32> -> vector<8x1xf32>
    %38 = arith.mulf %25, %37 : vector<8x1xf32>
    %39 = arith.addf %22, %38 : vector<8x1xf32>
    %c0_15 = arith.constant 0 : index
    %c0_16 = arith.constant 0 : index
    %40 = vector.load %arg5[%c0_15, %c0_16] : memref<1x1xf32, #tpu.memory_space<vmem>>, vector<1x1xf32>
    %cst_17 = arith.constant dense<0.000000e+00> : vector<1xf32>
    %41 = vector.multi_reduction <add>, %39, %cst_17 [0] : vector<8x1xf32> to vector<1xf32>
    %42 = vector.shape_cast %41 : vector<1xf32> to vector<1x1xf32>
    %43 = arith.addf %40, %42 : vector<1x1xf32>
    %c0_18 = arith.constant 0 : index
    %c0_19 = arith.constant 0 : index
    %44 = vector.load %arg5[%c0_18, %c0_19] : memref<1x1xf32, #tpu.memory_space<vmem>>, vector<1x1xf32>
    tpu.vector_store %arg5[%c0_18, %c0_19], %43 {strides = array<i32>} : memref<1x1xf32, #tpu.memory_space<vmem>>, vector<1x1xf32>,
    %c0_i32_20 = arith.constant 0 : i32
    %45 = arith.cmpi eq, %arg0, %c0_i32_20 : i32
    %46 = arith.extui %45 : i1 to i32
    %c0_i32_21 = arith.constant 0 : i32
    %47 = arith.cmpi ne, %46, %c0_i32_21 : i32
    scf.if %47 {
      %c0_22 = arith.constant 0 : index
      %c0_23 = arith.constant 0 : index
      %48 = vector.load %arg5[%c0_22, %c0_23] : memref<1x1xf32, #tpu.memory_space<vmem>>, vector<1x1xf32>
      %cst_24 = arith.constant -6.250000e-02 : f32
      %49 = vector.broadcast %cst_24 : f32 to vector<1x1xf32>
      %50 = arith.mulf %48, %49 : vector<1x1xf32>
      %c0_25 = arith.constant 0 : index
      %c0_26 = arith.constant 0 : index
      %51 = vector.load %arg5[%c0_25, %c0_26] : memref<1x1xf32, #tpu.memory_space<vmem>>, vector<1x1xf32>
      tpu.vector_store %arg5[%c0_25, %c0_26], %50 {strides = array<i32>} : memref<1x1xf32, #tpu.memory_space<vmem>>, vector<1x1xf32>,
    } else {
    }
    return
  }
  func.func @transform_0(%arg0: i32) -> (i32, i32) {
    %c0_i32 = arith.constant 0 : i32
    %c0_i32_0 = arith.constant 0 : i32
    return %arg0, %c0_i32 : i32, i32
  }
  func.func @transform_1(%arg0: i32) -> (i32, i32) {
    %c0_i32 = arith.constant 0 : i32
    %c0_i32_0 = arith.constant 0 : i32
    return %arg0, %c0_i32 : i32, i32
  }
  func.func @transform_2(%arg0: i32) -> (i32, i32) {
    %c0_i32 = arith.constant 0 : i32
    %c0_i32_0 = arith.constant 0 : i32
    return %arg0, %c0_i32 : i32, i32
  }
  func.func @transform_3(%arg0: i32) -> (i32, i32) {
    %c0_i32 = arith.constant 0 : i32
    %c0_i32_0 = arith.constant 0 : i32
    return %arg0, %c0_i32 : i32, i32
  }
  func.func @transform_4(%arg0: i32) -> (i32, i32) {
    %c0_i32 = arith.constant 0 : i32
    %c0_i32_0 = arith.constant 0 : i32
    %c0_i32_1 = arith.constant 0 : i32
    return %c0_i32, %c0_i32_0 : i32, i32
  }
}

</mosaic_0001>

<llo_original>
// kernel: tpu_custom_call.1
$region0: #{tpu_custom_call.1}
  #allocation0 [shape = 'u32[]', space=smem, size = 0x4, offset = 0x4, fixed_abs, tag = 'smem constant byte address 0x4 - core index']
  #allocation1 [shape = 'u32[72,128]{1,0:T(1,128)}', space=vmem, size = 0x9000, scoped, tag = 'internal scratch']
  %s0 = inlined_call_operand.hbm [shape: f32[8,32], index: 0, kind: input, shape index: {}]
  %s1 = inlined_call_operand.hbm [shape: f32[8,32], index: 1, kind: input, shape index: {}]
  %s2 = inlined_call_operand.hbm [shape: f32[8,32], index: 2, kind: input, shape index: {}]
  %s3 = inlined_call_operand.hbm [shape: f32[8,32], index: 3, kind: input, shape index: {}]
  %s4 = inlined_call_operand.hbm [shape: f32[1,1], index: 4, kind: output, shape index: {}]
  %s5 = sld [smem:[#allocation0]]
  $region50: #{tpu_custom_call.1} parent=0
    _
  %s7 = ssub.s32 1, %s5
  %s8 = scalar_select 0, %s7, %s5
  $region1: #{tpu_custom_call.1} parent=0
    #allocation2 [shape = 'u8[4096]{0}', space=vmem, size = 0x1000, scoped, tag = 'input window, operand 0, single buffered']
    #allocation3 [shape = 's32[1]{0}', space=sflag, size = 0x4, scoped, tag = 'scoped memory for tpu_custom_call.1']
    #allocation4 [shape = 's32[1]{0}', space=sflag, size = 0x4, scoped, tag = 'scoped memory for tpu_custom_call.1']
    #allocation5 [shape = 'u8[4096]{0}', space=vmem, size = 0x1000, scoped, tag = 'input window, operand 1, single buffered']
    #allocation6 [shape = 's32[1]{0}', space=sflag, size = 0x4, scoped, tag = 'scoped memory for tpu_custom_call.1']
    #allocation7 [shape = 'u8[4096]{0}', space=vmem, size = 0x1000, scoped, tag = 'input window, operand 2, single buffered']
    #allocation8 [shape = 'u8[4096]{0}', space=vmem, size = 0x1000, scoped, tag = 'input window, operand 3, single buffered']
    #allocation9 [shape = 's32[1]{0}', space=sflag, size = 0x4, scoped, tag = 'scoped memory for tpu_custom_call.1']
    #allocation10 [shape = 'u8[512]{0}', space=vmem, size = 0x400, scoped, tag = 'output window, operand 0, single buffered']
    %9 = vsyncpa [#allocation3], 0
    %10 = vsyncpa [#allocation6], 0
    %11 = vsyncpa [#allocation9], 0
    %12 = vsyncpa [#allocation4], 0
    // Predicated region
    $region2: #{tpu_custom_call.1} parent=1 // pred_check
      _
    $region3: #{tpu_custom_call.1} parent=1 // pred_check_branch
      %14 = sbr.rel (0) target = $region5
    $region4: #{tpu_custom_call.1} parent=1 // pred_region
      %16 = vsyncadd [#allocation3], 0
      %s18 = sshll.u32 %s0, 4
      %s19 = int_to_ptr.hbm [resolvable:$true] %s18
      %s20 = sshll.u32 [#allocation2], 4
      %s21 = int_to_ptr.vmem [resolvable:$true] %s20
      %23 = dma.hbm_to_vmem [thread:$0]  %s19, 128, %s21, [#allocation3]
    $region5: #{tpu_custom_call.1} parent=1 // pred_fallthru
      _
    // Predicated region
    $region6: #{tpu_custom_call.1} parent=1 // pred_check
      _
    $region7: #{tpu_custom_call.1} parent=1 // pred_check_branch
      %25 = sbr.rel (0) target = $region9
    $region8: #{tpu_custom_call.1} parent=1 // pred_region
      %27 = vsyncadd [#allocation6], 0
      %s29 = sshll.u32 %s1, 4
      %s30 = int_to_ptr.hbm [resolvable:$true] %s29
      %s31 = sshll.u32 [#allocation5], 4
      %s32 = int_to_ptr.vmem [resolvable:$true] %s31
      %34 = dma.hbm_to_vmem [thread:$0]  %s30, 128, %s32, [#allocation6]
    $region9: #{tpu_custom_call.1} parent=1 // pred_fallthru
      _
    // Predicated region
    $region10: #{tpu_custom_call.1} parent=1 // pred_check
      _
    $region11: #{tpu_custom_call.1} parent=1 // pred_check_branch
      %36 = sbr.rel (0) target = $region13
    $region12: #{tpu_custom_call.1} parent=1 // pred_region
      %38 = vsyncadd [#allocation6], 0
      %s40 = sshll.u32 %s2, 4
      %s41 = int_to_ptr.hbm [resolvable:$true] %s40
      %s42 = sshll.u32 [#allocation7], 4
      %s43 = int_to_ptr.vmem [resolvable:$true] %s42
      %45 = dma.hbm_to_vmem [thread:$0]  %s41, 128, %s43, [#allocation6]
    $region13: #{tpu_custom_call.1} parent=1 // pred_fallthru
      _
    // Predicated region
    $region14: #{tpu_custom_call.1} parent=1 // pred_check
      _
    $region15: #{tpu_custom_call.1} parent=1 // pred_check_branch
      %47 = sbr.rel (0) target = $region17
    $region16: #{tpu_custom_call.1} parent=1 // pred_region
      %49 = vsyncadd [#allocation9], 0
      %s51 = sshll.u32 %s3, 4
      %s52 = int_to_ptr.hbm [resolvable:$true] %s51
      %s53 = sshll.u32 [#allocation8], 4
      %s54 = int_to_ptr.vmem [resolvable:$true] %s53
      %56 = dma.hbm_to_vmem [thread:$0]  %s52, 128, %s54, [#allocation9]
    $region17: #{tpu_custom_call.1} parent=1 // pred_fallthru
      _
    // Predicated region
    $region18: #{tpu_custom_call.1} parent=1 // pred_check
      _
    $region19: #{tpu_custom_call.1} parent=1 // pred_check_branch
      %58 = sbr.rel (0) target = $region21
    $region20: #{tpu_custom_call.1} parent=1 // pred_region
      %60 = dma.done [#allocation3], 128
    $region21: #{tpu_custom_call.1} parent=1 // pred_fallthru
      _
    // Predicated region
    $region22: #{tpu_custom_call.1} parent=1 // pred_check
      _
    $region23: #{tpu_custom_call.1} parent=1 // pred_check_branch
      %62 = sbr.rel (0) target = $region25
    $region24: #{tpu_custom_call.1} parent=1 // pred_region
      %64 = dma.done [#allocation6], 128
    $region25: #{tpu_custom_call.1} parent=1 // pred_fallthru
      _
    // Predicated region
    $region26: #{tpu_custom_call.1} parent=1 // pred_check
      _
    $region27: #{tpu_custom_call.1} parent=1 // pred_check_branch
      %66 = sbr.rel (0) target = $region29
    $region28: #{tpu_custom_call.1} parent=1 // pred_region
      %68 = dma.done [#allocation6], 128
    $region29: #{tpu_custom_call.1} parent=1 // pred_fallthru
      _
    // Predicated region
    $region30: #{tpu_custom_call.1} parent=1 // pred_check
      _
    $region31: #{tpu_custom_call.1} parent=1 // pred_check_branch
      %70 = sbr.rel (0) target = $region33
    $region32: #{tpu_custom_call.1} parent=1 // pred_region
      %72 = dma.done [#allocation9], 128
    $region33: #{tpu_custom_call.1} parent=1 // pred_fallthru
      _
    %p73 = scmp.eq.s32.totalorder 0, 0
    // Predicated region
    $region34: #{tpu_custom_call.1} parent=1 // pred_check
      %p74 = pneg %p73
    $region35: #{tpu_custom_call.1} parent=1 // pred_check_branch
      %76 = sbr.rel (%p74) target = $region37
    $region36: #{tpu_custom_call.1} parent=1 // pred_region
      %vm77 = vcmask 0
      %78 = vst.msk [vmem:[#allocation10] sm:$0x1] %vm77, 0.0
    $region37: #{tpu_custom_call.1} parent=1 // pred_fallthru
      _
    %v79 = vld [vmem:[#allocation2] sm:$0xff]
    %v80 = vld [vmem:[#allocation5] sm:$0xff]
    %v81 = vld [vmem:[#allocation7] sm:$0xff]
    %v82 = vld [vmem:[#allocation8] sm:$0xff]
    %v83 = vmul.f32 %v79, %v82
    %vm84 = vcmask 261120
    %v85 = vsel %vm84, %v83, 0.0
    %86 = vadd.xlane.f32.xlu0 %v85
    %v87 = vpop.xlane.xlu0 %86
    %v88 = vmul.f32 %v79, %v79
    %v89 = vsel %vm84, %v88, 0.0
    %90 = vadd.xlane.f32.xlu0 %v89
    %v91 = vpop.xlane.xlu0 %90
    %v92 = vrsqrt.pop %v91
    %v93 = vmul.f32 %v92, %v91
    %v94 = vmul.f32 %v93, %v92
    %v95 = vmul.f32 0.5, %v94
    %v96 = vsub.f32 1.5, %v95
    %v97 = vmul.f32 %v92, %v96
    %v98 = vmul.f32 %v91, %v97
    %vm99 = vcmp.eq.f32.partialorder %v91, inf
    %v100 = vsel %vm99, %v91, %v98
    %vm101 = vcmp.eq.f32.partialorder %v91, 0.0
    %v102 = vand.u32 %v91, 2147483648
    %v103 = vsel %vm101, %v102, %v100
    %v104 = vmul.f32 %v82, %v82
    %v105 = vsel %vm84, %v104, 0.0
    %106 = vadd.xlane.f32.xlu0 %v105
    %v107 = vpop.xlane.xlu0 %106
    %v108 = vrsqrt.pop %v107
    %v109 = vmul.f32 %v108, %v107
    %v110 = vmul.f32 %v109, %v108
    %v111 = vmul.f32 0.5, %v110
    %v112 = vsub.f32 1.5, %v111
    %v113 = vmul.f32 %v108, %v112
    %v114 = vmul.f32 %v107, %v113
    %vm115 = vcmp.eq.f32.partialorder %v107, inf
    %v116 = vsel %vm115, %v107, %v114
    %vm117 = vcmp.eq.f32.partialorder %v107, 0.0
    %v118 = vand.u32 %v107, 2147483648
    %v119 = vsel %vm117, %v118, %v116
    %v120 = vmul.f32 %v103, %v119
    %v121 = vmax.f32 %v120, 1e-08
    %v122 = vrcp.pop %v121
    %v123 = vmul.f32 %v121, %v122
    %v124 = vsub.f32 1.0, %v123
    %v125 = vmul.f32 %v122, %v124
    %v126 = vadd.f32 %v122, %v125
    %vm127 = vweird.f32 %v121
    %vm128 = vweird.f32 %v122
    %vm129 = vmor %vm127, %vm128
    %v130 = vsel %vm129, %v122, %v126
    %v131 = vand.u32 2147483647, %v121
    %vm132 = vcmp.eq.f32.partialorder %v131, 8.507059e+37
    %v133 = vand.u32 %v121, 2147483648
    %v134 = vor.u32 1.1754944e-38, %v133
    %v135 = vsel %vm132, %v134, %v130
    %v136 = vmul.f32 %v87, %v135
    %v137 = vmul.f32 %v81, %v80
    %v138 = vsel %vm84, %v137, 0.0
    %139 = vadd.xlane.f32.xlu0 %v138
    %v140 = vpop.xlane.xlu0 %139
    %v141 = vmul.f32 %v81, %v81
    %v142 = vsel %vm84, %v141, 0.0
    %143 = vadd.xlane.f32.xlu0 %v142
    %v144 = vpop.xlane.xlu0 %143
    %v145 = vrsqrt.pop %v144
    %v146 = vmul.f32 %v145, %v144
    %v147 = vmul.f32 %v146, %v145
    %v148 = vmul.f32 0.5, %v147
    %v149 = vsub.f32 1.5, %v148
    %v150 = vmul.f32 %v145, %v149
    %v151 = vmul.f32 %v144, %v150
    %vm152 = vcmp.eq.f32.partialorder %v144, inf
    %v153 = vsel %vm152, %v144, %v151
    %vm154 = vcmp.eq.f32.partialorder %v144, 0.0
    %v155 = vand.u32 %v144, 2147483648
    %v156 = vsel %vm154, %v155, %v153
    %v157 = vmul.f32 %v80, %v80
    %v158 = vsel %vm84, %v157, 0.0
    %159 = vadd.xlane.f32.xlu0 %v158
    %v160 = vpop.xlane.xlu0 %159
    %v161 = vrsqrt.pop %v160
    %v162 = vmul.f32 %v161, %v160
    %v163 = vmul.f32 %v162, %v161
    %v164 = vmul.f32 0.5, %v163
    %v165 = vsub.f32 1.5, %v164
    %v166 = vmul.f32 %v161, %v165
    %v167 = vmul.f32 %v160, %v166
    %vm168 = vcmp.eq.f32.partialorder %v160, inf
    %v169 = vsel %vm168, %v160, %v167
    %vm170 = vcmp.eq.f32.partialorder %v160, 0.0
    %v171 = vand.u32 %v160, 2147483648
    %v172 = vsel %vm170, %v171, %v169
    %v173 = vmul.f32 %v156, %v172
    %v174 = vmax.f32 %v173, 1e-08
    %v175 = vrcp.pop %v174
    %v176 = vmul.f32 %v174, %v175
    %v177 = vsub.f32 1.0, %v176
    %v178 = vmul.f32 %v175, %v177
    %v179 = vadd.f32 %v175, %v178
    %vm180 = vweird.f32 %v174
    %vm181 = vweird.f32 %v175
    %vm182 = vmor %vm180, %vm181
    %v183 = vsel %vm182, %v175, %v179
    %v184 = vand.u32 2147483647, %v174
    %vm185 = vcmp.eq.f32.partialorder %v184, 8.507059e+37
    %v186 = vand.u32 %v174, 2147483648
    %v187 = vor.u32 1.1754944e-38, %v186
    %v188 = vsel %vm185, %v187, %v183
    %v189 = vmul.f32 %v140, %v188
    %v190 = vadd.f32 %v136, %v189
    %v191 = vld [vmem:[#allocation10] sm:$0x1]
    %v192 = vrot.slane %v190, 4
    %v193 = vadd.f32 %v190, %v192
    %v194 = vrot.slane %v193, 2
    %v195 = vadd.f32 %v193, %v194
    %v196 = vrot.slane %v195, 1
    %v197 = vadd.f32 %v195, %v196
    %v198 = vadd.f32 %v191, %v197
    %vm199 = vcmask 0
    %200 = vst.msk [vmem:[#allocation10] sm:$0x1] %vm199, %v198
    // Predicated region
    $region38: #{tpu_custom_call.1} parent=1 // pred_check
      %p201 = pneg %p73
    $region39: #{tpu_custom_call.1} parent=1 // pred_check_branch
      %203 = sbr.rel (%p201) target = $region41
    $region40: #{tpu_custom_call.1} parent=1 // pred_region
      %v204 = vld [vmem:[#allocation10] sm:$0x1]
      %v205 = vmul.f32 %v204, -0.0625
      %206 = vst.msk [vmem:[#allocation10] sm:$0x1] %vm199, %v205
    $region41: #{tpu_custom_call.1} parent=1 // pred_fallthru
      _
    // Predicated region
    $region42: #{tpu_custom_call.1} parent=1 // pred_check
      _
    $region43: #{tpu_custom_call.1} parent=1 // pred_check_branch
      %208 = sbr.rel (0) target = $region45
    $region44: #{tpu_custom_call.1} parent=1 // pred_region
      %210 = vsyncadd [#allocation4], 0
      %s212 = sshll.u32 [#allocation10], 4
      %s213 = int_to_ptr.vmem [resolvable:$true] %s212
      %s214 = sshll.u32 %s4, 4
      %s215 = int_to_ptr.hbm [resolvable:$true] %s214
      %217 = dma.vmem_to_hbm [thread:$0]  %s213, 16, %s215, [#allocation4]
    $region45: #{tpu_custom_call.1} parent=1 // pred_fallthru
      _
    // Predicated region
    $region46: #{tpu_custom_call.1} parent=1 // pred_check
      _
    $region47: #{tpu_custom_call.1} parent=1 // pred_check_branch
      %219 = sbr.rel (0) target = $region49
    $region48: #{tpu_custom_call.1} parent=1 // pred_region
      %221 = dma.done [#allocation4], 16
    $region49: #{tpu_custom_call.1} parent=1 // pred_fallthru
      _
    %222 = vsyncpa [#allocation3], 1
    %223 = vsyncpa [#allocation6], 1
    %224 = vsyncpa [#allocation9], 1
    %225 = vsyncpa [#allocation4], 1

</llo_original>
